<compile_context>
chip_gen: v7x
topology: tpu7x:2x2x1
jax: 0.10.0
libtpu: 0.0.40
codegen_flags: <defaults>
</compile_context>

<pallas_src>
import functools

import jax
import jax.numpy as jnp
from jax.experimental import pallas as pl
from jax.experimental.pallas import tpu as pltpu

SMOOTHING = 0.1


def _choose_tile_m(n_rows, n_classes, itemsize):
    """Row tile: ~2 MiB preds block, multiple of the sublane pack, >= ~8 steps."""
    sub = 16 if itemsize <= 2 else 8          # bf16 packs 16 sublanes/vreg
    tm = ((2 << 20) // max(1, n_classes * itemsize)) // sub * sub
    tm = max(sub, tm)
    n_pad = -(-n_rows // sub) * sub
    if n_pad // tm < 8:                       # prefer >= ~8 pipeline steps
        tm = max(sub, (-(-n_pad // 8) + sub - 1) // sub * sub)
    return min(tm, n_pad)


def _label_smoothing_kernel(preds_ref, target_ref, out_ref, *,
                            n_rows, n_classes, padded_rows):
    """Writes per-tile partial sums: out[0,0]=sum(-sum_c logp), out[0,1]=sum(-logp[t])."""
    tm = preds_ref.shape[0]
    x = preds_ref[...].astype(jnp.float32)                    # (TM, C)
    t = target_ref[...]                                       # (TM, 1) int32

    # Row-wise logZ (stable log-sum-exp); logp is never materialized.
    m = jnp.max(x, axis=-1, keepdims=True)
    lse = jnp.log(jnp.sum(jnp.exp(x - m), axis=-1, keepdims=True))
    logz = m + lse                                             # (TM, 1)

    # Smoothing term per row: -sum_c logp = C*logZ - sum_c x.
    smooth_rows = n_classes * logz - jnp.sum(x, axis=-1, keepdims=True)

    # NLL term per row: -logp[target] = logZ - x[target] (one-hot mask on x).
    cols = jax.lax.broadcasted_iota(jnp.int32, x.shape, 1)
    x_t = jnp.sum(jnp.where(cols == t, x, 0.0), axis=-1, keepdims=True)
    nll_rows = logz - x_t

    if padded_rows != n_rows:                                  # static branch
        row = (pl.program_id(0) * tm
               + jax.lax.broadcasted_iota(jnp.int32, (tm, 1), 0))
        valid = (row < n_rows).astype(jnp.float32)
        smooth_rows = smooth_rows * valid
        nll_rows = nll_rows * valid

    out_ref[0, 0] = jnp.sum(smooth_rows)
    out_ref[0, 1] = jnp.sum(nll_rows)


def label_smoothing_loss(preds, target, smoothing=SMOOTHING, tile_m=None):
    """preds: (N, C) float (f32 or bf16, fed in native dtype); target: (N,) int."""
    N, C = preds.shape
    itemsize = preds.dtype.itemsize
    sub = 16 if itemsize <= 2 else 8
    if tile_m is None:
        tile_m = _choose_tile_m(N, C, itemsize)
    assert tile_m % sub == 0, "tile_m must be a multiple of the sublane pack"

    n_pad = -(-N // tile_m) * tile_m
    if n_pad != N:
        preds = jnp.pad(preds, ((0, n_pad - N), (0, 0)))
        target = jnp.pad(target, (0, n_pad - N))
    target2d = target.astype(jnp.int32).reshape(n_pad, 1)
    num_tiles = n_pad // tile_m

    # Explicit VMEM budget: 2x double-buffered preds block + targets + headroom.
    block_bytes = tile_m * C * itemsize + tile_m * 4
    vmem_limit = int(min(64 << 20, max(16 << 20, 4 * block_bytes + (2 << 20))))

    kernel = functools.partial(
        _label_smoothing_kernel, n_rows=N, n_classes=C, padded_rows=n_pad)

    partials = pl.pallas_call(
        kernel,
        out_shape=jax.ShapeDtypeStruct((num_tiles, 2), jnp.float32),
        grid_spec=pltpu.PrefetchScalarGridSpec(
            num_scalar_prefetch=0,
            grid=(num_tiles,),
            in_specs=[
                pl.BlockSpec((tile_m, C), lambda i: (i, 0)),
                pl.BlockSpec((tile_m, 1), lambda i: (i, 0)),
            ],
            out_specs=pl.BlockSpec((1, 2), lambda i: (i, 0),
                                   memory_space=pltpu.MemorySpace.SMEM),
        ),
        compiler_params=pltpu.CompilerParams(
            dimension_semantics=("parallel",),
            vmem_limit_bytes=vmem_limit),
    )(preds, target2d)

    # reduction='mean' over rows; final linear combination (glue in JAX).
    sums = jnp.sum(partials, axis=0)
    loss_mean = sums[0] / N
    nll_mean = sums[1] / N
    return smoothing * (loss_mean / C) + (1.0 - smoothing) * nll_mean


def _reference(preds, target, smoothing=SMOOTHING):
    logp = jax.nn.log_softmax(preds.astype(jnp.float32), axis=-1)
    loss = jnp.mean(-jnp.sum(logp, axis=-1))
    nll = jnp.mean(-logp[jnp.arange(preds.shape[0]), target])
    n = preds.shape[-1]
    return smoothing * (loss / n) + (1.0 - smoothing) * nll


if __name__ == "__main__":
    key = jax.random.PRNGKey(0)
    k1, k2 = jax.random.split(key)
    N, C = 8, 32
    preds = jax.random.normal(k1, (N, C), dtype=jnp.float32)
    target = jax.random.randint(k2, (N,), 0, C, dtype=jnp.int32)

    out = label_smoothing_loss(preds, target)
    out = jax.block_until_ready(out)

    ref = _reference(preds, target)
    assert jnp.allclose(out, ref, atol=1e-5, rtol=1e-5), (out, ref)

    # Second check: N not divisible by the tile (exercises the padding mask).
    N2, C2 = 20, 32
    preds2 = jax.random.normal(k1, (N2, C2), dtype=jnp.float32)
    target2 = jax.random.randint(k2, (N2,), 0, C2, dtype=jnp.int32)
    out2 = jax.block_until_ready(label_smoothing_loss(preds2, target2, tile_m=8))
    ref2 = _reference(preds2, target2)
    assert jnp.allclose(out2, ref2, atol=1e-5, rtol=1e-5), (out2, ref2)

    print("KERNEL_OK")
</pallas_src>

<mosaic_0001>
module attributes {stable_mosaic.version = 11 : i64} {
  func.func @_label_smoothing_kernel(%arg0: i32, %arg1: memref<8x32xf32, #tpu.memory_space<vmem>>, %arg2: memref<8x1xi32, #tpu.memory_space<vmem>>, %arg3: memref<1x2xf32, #tpu.memory_space<smem>>) attributes {dimension_semantics = [#tpu.dimension_semantics<parallel>], iteration_bounds = array<i64: 1>, scalar_prefetch = 0 : i64, scratch_operands = 0 : i64, tpu.core_type = #tpu.core_type<tc>, window_params = [{transform_indices = @transform_0, window_bounds = array<i64: 8, 32>}, {transform_indices = @transform_1, window_bounds = array<i64: 8, 1>}, {transform_indices = @transform_2, window_bounds = array<i64: 1, 2>}]} {
    %c0 = arith.constant 0 : index
    %c0_0 = arith.constant 0 : index
    %0 = vector.load %arg1[%c0, %c0_0] : memref<8x32xf32, #tpu.memory_space<vmem>>, vector<8x32xf32>
    %c0_1 = arith.constant 0 : index
    %c0_2 = arith.constant 0 : index
    %1 = vector.load %arg2[%c0_1, %c0_2] : memref<8x1xi32, #tpu.memory_space<vmem>>, vector<8x1xi32>
    %cst = arith.constant dense<0xFF800000> : vector<8xf32>
    %2 = vector.multi_reduction <maximumf>, %0, %cst [1] : vector<8x32xf32> to vector<8xf32>
    %3 = vector.shape_cast %2 : vector<8xf32> to vector<8x1xf32>
    %4 = vector.broadcast %3 : vector<8x1xf32> to vector<8x32xf32>
    %5 = arith.subf %0, %4 : vector<8x32xf32>
    %6 = math.exp %5 : vector<8x32xf32>
    %cst_3 = arith.constant dense<0.000000e+00> : vector<8xf32>
    %7 = vector.multi_reduction <add>, %6, %cst_3 [1] : vector<8x32xf32> to vector<8xf32>
    %8 = vector.shape_cast %7 : vector<8xf32> to vector<8x1xf32>
    %9 = math.log %8 : vector<8x1xf32>
    %10 = arith.addf %3, %9 : vector<8x1xf32>
    %cst_4 = arith.constant 3.200000e+01 : f32
    %11 = vector.broadcast %cst_4 : f32 to vector<8x1xf32>
    %12 = arith.mulf %11, %10 : vector<8x1xf32>
    %cst_5 = arith.constant dense<0.000000e+00> : vector<8xf32>
    %13 = vector.multi_reduction <add>, %0, %cst_5 [1] : vector<8x32xf32> to vector<8xf32>
    %14 = vector.shape_cast %13 : vector<8xf32> to vector<8x1xf32>
    %15 = arith.subf %12, %14 : vector<8x1xf32>
    %16 = tpu.iota {dimensions = array<i32: 1>} : vector<8x32xi32>
    %17 = vector.broadcast %1 : vector<8x1xi32> to vector<8x32xi32>
    %18 = arith.cmpi eq, %16, %17 : vector<8x32xi32>
    %cst_6 = arith.constant 0.000000e+00 : f32
    %19 = vector.broadcast %cst_6 : f32 to vector<8x32xf32>
    %20 = arith.select %18, %0, %19 : vector<8x32xi1>, vector<8x32xf32>
    %cst_7 = arith.constant dense<0.000000e+00> : vector<8xf32>
    %21 = vector.multi_reduction <add>, %20, %cst_7 [1] : vector<8x32xf32> to vector<8xf32>
    %22 = vector.shape_cast %21 : vector<8xf32> to vector<8x1xf32>
    %23 = arith.subf %10, %22 : vector<8x1xf32>
    %24 = vector.shape_cast %15 : vector<8x1xf32> to vector<1x8x1xf32>
    %cst_8 = arith.constant dense<0.000000e+00> : vector<1xf32>
    %25 = vector.multi_reduction <add>, %24, %cst_8 [1, 2] : vector<1x8x1xf32> to vector<1xf32>
    %26 = vector.shape_cast %25 : vector<1xf32> to vector<1x1x1xf32>
    %27 = vector.extract %26[0, 0, 0] : f32 from vector<1x1x1xf32>
    %c0_9 = arith.constant 0 : index
    %c0_10 = arith.constant 0 : index
    %28 = memref.load %arg3[%c0_9, %c0_10] : memref<1x2xf32, #tpu.memory_space<smem>>
    memref.store %27, %arg3[%c0_9, %c0_10] : memref<1x2xf32, #tpu.memory_space<smem>>
    %29 = vector.shape_cast %23 : vector<8x1xf32> to vector<1x8x1xf32>
    %cst_11 = arith.constant dense<0.000000e+00> : vector<1xf32>
    %30 = vector.multi_reduction <add>, %29, %cst_11 [1, 2] : vector<1x8x1xf32> to vector<1xf32>
    %31 = vector.shape_cast %30 : vector<1xf32> to vector<1x1x1xf32>
    %32 = vector.extract %31[0, 0, 0] : f32 from vector<1x1x1xf32>
    %c0_12 = arith.constant 0 : index
    %c1 = arith.constant 1 : index
    %33 = memref.load %arg3[%c0_12, %c1] : memref<1x2xf32, #tpu.memory_space<smem>>
    memref.store %32, %arg3[%c0_12, %c1] : memref<1x2xf32, #tpu.memory_space<smem>>
    return
  }
  func.func @transform_0(%arg0: i32) -> (i32, i32) {
    %c0_i32 = arith.constant 0 : i32
    %c0_i32_0 = arith.constant 0 : i32
    return %arg0, %c0_i32 : i32, i32
  }
  func.func @transform_1(%arg0: i32) -> (i32, i32) {
    %c0_i32 = arith.constant 0 : i32
    %c0_i32_0 = arith.constant 0 : i32
    return %arg0, %c0_i32 : i32, i32
  }
  func.func @transform_2(%arg0: i32) -> (i32, i32) {
    %c0_i32 = arith.constant 0 : i32
    %c0_i32_0 = arith.constant 0 : i32
    return %arg0, %c0_i32 : i32, i32
  }
}

</mosaic_0001>

<llo_original>
// kernel: tpu_custom_call.1
$region0: #{tpu_custom_call.1}
  #allocation0 [shape = 'u32[]', space=smem, size = 0x4, offset = 0x4, fixed_abs, tag = 'smem constant byte address 0x4 - core index']
  #allocation1 [shape = 'u32[144,128]{1,0:T(1,128)}', space=vmem, size = 0x12000, scoped, tag = 'internal scratch']
  %s0 = inlined_call_operand.vmem [shape: f32[8,32], index: 0, kind: input, shape index: {}]
  %s1 = inlined_call_operand.vmem [shape: s32[8,1], index: 1, kind: input, shape index: {}]
  %s2 = inlined_call_operand.hbm [shape: f32[1,2], index: 2, kind: output, shape index: {}]
  %s3 = sld [smem:[#allocation0]]
  $region18: #{tpu_custom_call.1} parent=0
    _
  %s5 = ssub.s32 1, %s3
  %s6 = scalar_select 0, %s5, %s3
  $region1: #{tpu_custom_call.1} parent=0
    #allocation2 [shape = 'u8[512]{0}', space=smem, size = 0x200, scoped, tag = 'output window, operand 0, single buffered']
    #allocation3 [shape = 's32[1]{0}', space=sflag, size = 0x4, scoped, tag = 'scoped memory for tpu_custom_call.1']
    %7 = vsyncpa [#allocation3], 0
    // Predicated region
    $region2: #{tpu_custom_call.1} parent=1 // pred_check
      _
    $region3: #{tpu_custom_call.1} parent=1 // pred_check_branch
      %9 = sbr.rel (0) target = $region5
    $region4: #{tpu_custom_call.1} parent=1 // pred_region
      _
    $region5: #{tpu_custom_call.1} parent=1 // pred_fallthru
      _
    // Predicated region
    $region6: #{tpu_custom_call.1} parent=1 // pred_check
      _
    $region7: #{tpu_custom_call.1} parent=1 // pred_check_branch
      %11 = sbr.rel (0) target = $region9
    $region8: #{tpu_custom_call.1} parent=1 // pred_region
      _
    $region9: #{tpu_custom_call.1} parent=1 // pred_fallthru
      _
    %v12 = vld [vmem:[%s0] sm:$0xff]
    %v13 = vld [vmem:[%s1] sm:$0xff]
    %vm14 = vcmask 261120
    %v15 = vsel %vm14, %v12, -inf
    %16 = vmax.xlane.f32.xlu0 %v15
    %v17 = vpop.xlane.xlu0 %16
    %v18 = vsub.f32 %v12, %v17
    %v19 = vmul.f32 %v18, 1.442695
    %v20 = vpow.pop %v19
    %v21 = vsel %vm14, %v20, 0.0
    %22 = vadd.xlane.f32.xlu0 %v21
    %v23 = vpop.xlane.xlu0 %22
    %v24 = vlog2.pop %v23
    %v25 = vmul.f32 %v24, 0.6931472
    %v26 = vadd.f32 %v17, %v25
    %v27 = vmul.f32 %v26, 32.0
    %v28 = vsel %vm14, %v12, 0.0
    %29 = vadd.xlane.f32.xlu0 %v28
    %v30 = vpop.xlane.xlu0 %29
    %v31 = vsub.f32 %v27, %v30
    %v32 = vlaneseq
    %v33 = vand.u32 %v32, 127
    %34 = vset.pattern.permute.xlu0 0
    %35 = vperm.xlu0 %34, %v13
    %v36 = vpop.permute.xlu0 %35
    %vm37 = vcmp.eq.s32.totalorder %v33, %v36
    %v38 = vsel %vm37, %v12, 0.0
    %v39 = vsel %vm14, %v38, 0.0
    %40 = vadd.xlane.f32.xlu0 %v39
    %v41 = vpop.xlane.xlu0 %40
    %v42 = vsub.f32 %v26, %v41
    %vm43 = vcmask 7168
    %v44 = vsel %vm43, %v31, 0.0
    %45 = vadd.xlane.f32.xlu0 %v44
    %v46 = vpop.xlane.xlu0 %45
    %v47 = vrot.slane %v46, 4
    %v48 = vadd.f32 %v46, %v47
    %v49 = vrot.slane %v48, 2
    %v50 = vadd.f32 %v48, %v49
    %v51 = vrot.slane %v50, 1
    %v52 = vadd.f32 %v50, %v51
    %s53 = vtos %v52
    %s54 = scalar_lea.smem [#allocation2], 0
    %55 = sst [smem:[%s54]] %s53
    %v56 = vsel %vm43, %v42, 0.0
    %57 = vadd.xlane.f32.xlu0 %v56
    %v58 = vpop.xlane.xlu0 %57
    %v59 = vrot.slane %v58, 4
    %v60 = vadd.f32 %v58, %v59
    %v61 = vrot.slane %v60, 2
    %v62 = vadd.f32 %v60, %v61
    %v63 = vrot.slane %v62, 1
    %v64 = vadd.f32 %v62, %v63
    %s65 = vtos %v64
    %s66 = scalar_lea.smem [#allocation2], 1
    %67 = sst [smem:[%s66]] %s65
    // Predicated region
    $region10: #{tpu_custom_call.1} parent=1 // pred_check
      _
    $region11: #{tpu_custom_call.1} parent=1 // pred_check_branch
      %69 = sbr.rel (0) target = $region13
    $region12: #{tpu_custom_call.1} parent=1 // pred_region
      %s71 = ssub.s32 16, 16
      %72 = vsyncadd [#allocation3], %s71
      %75 = dma.smem_to_hbm [#allocation2], 16, %s2, [#allocation3]
    $region13: #{tpu_custom_call.1} parent=1 // pred_fallthru
      _
    // Predicated region
    $region14: #{tpu_custom_call.1} parent=1 // pred_check
      _
    $region15: #{tpu_custom_call.1} parent=1 // pred_check_branch
      %77 = sbr.rel (0) target = $region17
    $region16: #{tpu_custom_call.1} parent=1 // pred_region
      %78 = dma.done [#allocation3], 16
    $region17: #{tpu_custom_call.1} parent=1 // pred_fallthru
      _
    %79 = sfence
    %80 = vsyncpa [#allocation3], 1

</llo_original>
